<compile_context>
chip_gen: v7x
topology: tpu7x:2x2x1
jax: 0.10.0
libtpu: 0.0.40
codegen_flags: <defaults>
</compile_context>

<pallas_src>
import functools

import numpy as np

import jax
import jax.numpy as jnp
from jax.experimental import pallas as pl
from jax.experimental.pallas import tpu as pltpu


# ---------------------------------------------------------------------------
# FLAGS / SWLayerNorm index selection (static, resolved in the wrapper)
# ---------------------------------------------------------------------------
class _Flags:
    num_list = [1.0, 0.75]
    quant_list = [8, 4]


FLAGS = _Flags()


def sw_layernorm_params(ln_weights, ln_biases, width_mult, quant_bits):
    """Replicates SWLayerNorm's ModuleList indexing with a static index."""
    idx = int(
        FLAGS.num_list.index(width_mult) * len(FLAGS.quant_list)
        + FLAGS.quant_list.index(quant_bits)
    )
    return ln_weights[idx], ln_biases[idx]


# ---------------------------------------------------------------------------
# Pallas kernel: fused LayerNorm(D) -> Linear(D, H)
# ---------------------------------------------------------------------------
def _round_up(x, m):
    return ((x + m - 1) // m) * m


def _prenorm_linear_kernel(x_ref, gamma_ref, beta_ref, w_ref, b_ref, o_ref,
                           xn_ref, *, eps):
    """One (tm, tn) output tile.  Grid = (rows i, hidden j)."""
    j = pl.program_id(1)

    # Compute LayerNorm of this row tile once (j == 0), cache in f32 scratch.
    @pl.when(j == 0)
    def _():
        x = x_ref[...].astype(jnp.float32)                 # (tm, D)
        mean = jnp.mean(x, axis=-1, keepdims=True)
        xc = x - mean
        var = jnp.mean(xc * xc, axis=-1, keepdims=True)    # biased (PyTorch)
        inv = jax.lax.rsqrt(var + eps)                     # EUP slot, ~free
        g = gamma_ref[...].astype(jnp.float32)             # (1, D) broadcast
        bt = beta_ref[...].astype(jnp.float32)             # (1, D) broadcast
        xn_ref[...] = xc * inv * g + bt

    # MXU matmul with f32 accumulation, bias add, cast only at final store.
    acc = jnp.dot(xn_ref[...], w_ref[...].astype(jnp.float32),
                  preferred_element_type=jnp.float32)      # (tm, tn)
    acc = acc + b_ref[...].astype(jnp.float32)             # (1, tn) bias
    o_ref[...] = acc.astype(o_ref.dtype)


def prenorm_linear(x, ln_weight, ln_bias, w, b, *, eps=1e-5,
                   block_m=128, block_n=512):
    """PreNorm(dim, fn=Linear(dim, hidden)).forward(x).

    x:         (..., D)
    ln_weight: (D,)   selected gamma
    ln_bias:   (D,)   selected beta
    w:         (D, H) Linear weight (already transposed to matmul layout)
    b:         (H,)   Linear bias
    returns    (..., H)
    """
    *lead, D = x.shape
    H = w.shape[1]
    assert w.shape == (D, H)
    M = int(np.prod(lead)) if lead else 1

    x2 = x.reshape(M, D)

    # Row tile: multiple of 8 sublanes (f32); pad rows if needed.
    tm = min(block_m, _round_up(M, 8))
    tm = _round_up(tm, 8)
    Mp = _round_up(M, tm)
    if Mp != M:
        x2 = jnp.pad(x2, ((0, Mp - M), (0, 0)))

    # Hidden tile: lane-dense (multiple of 128) or the full H.
    if (H % 128 == 0) and (block_n % 128 == 0) and (H % block_n == 0) \
            and (block_n < H):
        tn = block_n
    else:
        tn = H

    gamma2 = ln_weight.reshape(1, D)
    beta2 = ln_bias.reshape(1, D)
    b2 = b.reshape(1, H)

    grid = (Mp // tm, H // tn)

    out = pl.pallas_call(
        functools.partial(_prenorm_linear_kernel, eps=eps),
        out_shape=jax.ShapeDtypeStruct((Mp, H), x.dtype),
        grid_spec=pltpu.PrefetchScalarGridSpec(
            num_scalar_prefetch=0,
            grid=grid,
            in_specs=[
                pl.BlockSpec((tm, D), lambda i, j: (i, 0)),   # x rows
                pl.BlockSpec((1, D), lambda i, j: (0, 0)),    # gamma
                pl.BlockSpec((1, D), lambda i, j: (0, 0)),    # beta
                pl.BlockSpec((D, tn), lambda i, j: (0, j)),   # weight
                pl.BlockSpec((1, tn), lambda i, j: (0, j)),   # linear bias
            ],
            out_specs=pl.BlockSpec((tm, tn), lambda i, j: (i, j)),
            scratch_shapes=[pltpu.VMEM((tm, D), jnp.float32)],  # cached LN tile
        ),
        compiler_params=pltpu.CompilerParams(
            # rows: independent -> megacore-shardable; hidden: sequential so
            # the cached LN scratch (written at j==0) stays valid.
            dimension_semantics=("parallel", "arbitrary")),
    )(x2, gamma2, beta2, w, b2)

    if Mp != M:
        out = out[:M]
    return out.reshape(*lead, H)


# ---------------------------------------------------------------------------
# Pure-JAX reference (matches torch layer_norm + linear)
# ---------------------------------------------------------------------------
def _reference(x, gamma, beta, w, b, eps=1e-5):
    xf = x.astype(jnp.float32)
    mean = jnp.mean(xf, axis=-1, keepdims=True)
    xc = xf - mean
    var = jnp.mean(xc * xc, axis=-1, keepdims=True)
    xn = xc * jax.lax.rsqrt(var + eps) * gamma.astype(jnp.float32) \
        + beta.astype(jnp.float32)
    out = xn @ w.astype(jnp.float32) + b.astype(jnp.float32)
    return out.astype(x.dtype)


# ---------------------------------------------------------------------------
# Demo / correctness check
# ---------------------------------------------------------------------------
if __name__ == "__main__":
    key = jax.random.PRNGKey(0)
    B, N, D, H = 2, 128, 64, 256          # (batch, tokens, dim, hidden)
    k1, k2, k3, k4, k5 = jax.random.split(key, 5)

    x = jax.random.normal(k1, (B, N, D), dtype=jnp.float32)

    n_variants = len(FLAGS.num_list) * len(FLAGS.quant_list)
    ln_w = 1.0 + 0.05 * jax.random.normal(k2, (n_variants, D), jnp.float32)
    ln_b = 0.05 * jax.random.normal(k3, (n_variants, D), jnp.float32)

    w = jax.random.normal(k4, (D, H), jnp.float32) / np.sqrt(D)
    b = 0.1 * jax.random.normal(k5, (H,), jnp.float32)

    # SWLayerNorm ModuleList selection, done statically in the wrapper.
    gamma, beta = sw_layernorm_params(ln_w, ln_b, width_mult=0.75, quant_bits=4)

    # block_n=128 exercises the (rows, hidden) grid + cached-LN path:
    # grid = (2, 2) at these shapes.
    out = prenorm_linear(x, gamma, beta, w, b, block_m=128, block_n=128)
    out = jax.block_until_ready(out)

    ref = _reference(x, gamma, beta, w, b)
    err = float(jnp.max(jnp.abs(out - ref)))
    assert out.shape == (B, N, H), out.shape
    assert err < 1e-4, f"max abs error vs reference: {err}"
    print("KERNEL_OK")
</pallas_src>

<mosaic_0001>
module attributes {stable_mosaic.version = 11 : i64} {
  func.func @_prenorm_linear_kernel(%arg0: i32, %arg1: i32, %arg2: memref<128x64xf32, #tpu.memory_space<vmem>>, %arg3: memref<1x64xf32, #tpu.memory_space<vmem>>, %arg4: memref<1x64xf32, #tpu.memory_space<vmem>>, %arg5: memref<64x128xf32, #tpu.memory_space<vmem>>, %arg6: memref<1x128xf32, #tpu.memory_space<vmem>>, %arg7: memref<128x128xf32, #tpu.memory_space<vmem>>, %arg8: memref<128x64xf32, #tpu.memory_space<vmem>>) attributes {dimension_semantics = [#tpu.dimension_semantics<parallel>, #tpu.dimension_semantics<arbitrary>], iteration_bounds = array<i64: 2, 2>, scalar_prefetch = 0 : i64, scratch_operands = 1 : i64, tpu.core_type = #tpu.core_type<tc>, window_params = [{transform_indices = @transform_0, window_bounds = array<i64: 128, 64>}, {pipeline_mode = #tpu.pipeline_mode<synchronous>, transform_indices = @transform_1, window_bounds = array<i64: 1, 64>}, {pipeline_mode = #tpu.pipeline_mode<synchronous>, transform_indices = @transform_2, window_bounds = array<i64: 1, 64>}, {transform_indices = @transform_3, window_bounds = array<i64: 64, 128>}, {transform_indices = @transform_4, window_bounds = array<i64: 1, 128>}, {transform_indices = @transform_5, window_bounds = array<i64: 128, 128>}]} {
    %c0_i32 = arith.constant 0 : i32
    %0 = arith.cmpi eq, %arg1, %c0_i32 : i32
    %1 = arith.extui %0 : i1 to i32
    %c0_i32_0 = arith.constant 0 : i32
    %2 = arith.cmpi ne, %1, %c0_i32_0 : i32
    scf.if %2 {
      %c0_8 = arith.constant 0 : index
      %c0_9 = arith.constant 0 : index
      %10 = vector.load %arg2[%c0_8, %c0_9] : memref<128x64xf32, #tpu.memory_space<vmem>>, vector<128x64xf32>
      %cst_10 = arith.constant dense<0.000000e+00> : vector<128xf32>
      %11 = vector.multi_reduction <add>, %10, %cst_10 [1] : vector<128x64xf32> to vector<128xf32>
      %12 = vector.shape_cast %11 : vector<128xf32> to vector<128x1xf32>
      %cst_11 = arith.constant 6.400000e+01 : f32
      %13 = vector.broadcast %cst_11 : f32 to vector<128x1xf32>
      %14 = arith.divf %12, %13 : vector<128x1xf32>
      %15 = vector.broadcast %14 : vector<128x1xf32> to vector<128x64xf32>
      %16 = arith.subf %10, %15 : vector<128x64xf32>
      %17 = arith.mulf %16, %16 : vector<128x64xf32>
      %cst_12 = arith.constant dense<0.000000e+00> : vector<128xf32>
      %18 = vector.multi_reduction <add>, %17, %cst_12 [1] : vector<128x64xf32> to vector<128xf32>
      %19 = vector.shape_cast %18 : vector<128xf32> to vector<128x1xf32>
      %cst_13 = arith.constant 6.400000e+01 : f32
      %20 = vector.broadcast %cst_13 : f32 to vector<128x1xf32>
      %21 = arith.divf %19, %20 : vector<128x1xf32>
      %cst_14 = arith.constant 9.99999974E-6 : f32
      %22 = vector.broadcast %cst_14 : f32 to vector<128x1xf32>
      %23 = arith.addf %21, %22 : vector<128x1xf32>
      %24 = math.rsqrt %23 : vector<128x1xf32>
      %c0_15 = arith.constant 0 : index
      %c0_16 = arith.constant 0 : index
      %25 = vector.load %arg3[%c0_15, %c0_16] : memref<1x64xf32, #tpu.memory_space<vmem>>, vector<1x64xf32>
      %c0_17 = arith.constant 0 : index
      %c0_18 = arith.constant 0 : index
      %26 = vector.load %arg4[%c0_17, %c0_18] : memref<1x64xf32, #tpu.memory_space<vmem>>, vector<1x64xf32>
      %27 = vector.broadcast %24 : vector<128x1xf32> to vector<128x64xf32>
      %28 = arith.mulf %16, %27 : vector<128x64xf32>
      %29 = vector.broadcast %25 : vector<1x64xf32> to vector<128x64xf32>
      %30 = arith.mulf %28, %29 : vector<128x64xf32>
      %31 = vector.broadcast %26 : vector<1x64xf32> to vector<128x64xf32>
      %32 = arith.addf %30, %31 : vector<128x64xf32>
      %c0_19 = arith.constant 0 : index
      %c0_20 = arith.constant 0 : index
      %33 = vector.load %arg8[%c0_19, %c0_20] : memref<128x64xf32, #tpu.memory_space<vmem>>, vector<128x64xf32>
      tpu.vector_store %arg8[%c0_19, %c0_20], %32 {strides = array<i32>} : memref<128x64xf32, #tpu.memory_space<vmem>>, vector<128x64xf32>,
    } else {
    }
    %c0 = arith.constant 0 : index
    %c0_1 = arith.constant 0 : index
    %3 = vector.load %arg8[%c0, %c0_1] : memref<128x64xf32, #tpu.memory_space<vmem>>, vector<128x64xf32>
    %c0_2 = arith.constant 0 : index
    %c0_3 = arith.constant 0 : index
    %4 = vector.load %arg5[%c0_2, %c0_3] : memref<64x128xf32, #tpu.memory_space<vmem>>, vector<64x128xf32>
    %cst = arith.constant dense<0.000000e+00> : vector<128x128xf32>
    %5 = tpu.matmul %3, %4, %cst {dimension_numbers = #tpu.dot_dimension_numbers<[1], [0], [0], [1], [0, 0, 1, 1], [], []>} : vector<128x64xf32>, vector<64x128xf32>, vector<128x128xf32> -> vector<128x128xf32>
    %c0_4 = arith.constant 0 : index
    %c0_5 = arith.constant 0 : index
    %6 = vector.load %arg6[%c0_4, %c0_5] : memref<1x128xf32, #tpu.memory_space<vmem>>, vector<1x128xf32>
    %7 = vector.broadcast %6 : vector<1x128xf32> to vector<128x128xf32>
    %8 = arith.addf %5, %7 : vector<128x128xf32>
    %c0_6 = arith.constant 0 : index
    %c0_7 = arith.constant 0 : index
    %9 = vector.load %arg7[%c0_6, %c0_7] : memref<128x128xf32, #tpu.memory_space<vmem>>, vector<128x128xf32>
    tpu.vector_store %arg7[%c0_6, %c0_7], %8 {strides = array<i32>} : memref<128x128xf32, #tpu.memory_space<vmem>>, vector<128x128xf32>,
    return
  }
  func.func @transform_0(%arg0: i32, %arg1: i32) -> (i32, i32) {
    %c0_i32 = arith.constant 0 : i32
    %c0_i32_0 = arith.constant 0 : i32
    return %arg0, %c0_i32 : i32, i32
  }
  func.func @transform_1(%arg0: i32, %arg1: i32) -> (i32, i32) {
    %c0_i32 = arith.constant 0 : i32
    %c0_i32_0 = arith.constant 0 : i32
    %c0_i32_1 = arith.constant 0 : i32
    return %c0_i32, %c0_i32_0 : i32, i32
  }
  func.func @transform_2(%arg0: i32, %arg1: i32) -> (i32, i32) {
    %c0_i32 = arith.constant 0 : i32
    %c0_i32_0 = arith.constant 0 : i32
    %c0_i32_1 = arith.constant 0 : i32
    return %c0_i32, %c0_i32_0 : i32, i32
  }
  func.func @transform_3(%arg0: i32, %arg1: i32) -> (i32, i32) {
    %c0_i32 = arith.constant 0 : i32
    %c0_i32_0 = arith.constant 0 : i32
    return %c0_i32, %arg1 : i32, i32
  }
  func.func @transform_4(%arg0: i32, %arg1: i32) -> (i32, i32) {
    %c0_i32 = arith.constant 0 : i32
    %c0_i32_0 = arith.constant 0 : i32
    return %c0_i32, %arg1 : i32, i32
  }
  func.func @transform_5(%arg0: i32, %arg1: i32) -> (i32, i32) {
    %c0_i32 = arith.constant 0 : i32
    return %arg0, %arg1 : i32, i32
  }
}

</mosaic_0001>

<llo_original>
// kernel: tpu_custom_call.1
$region0: #{tpu_custom_call.1}
  #allocation0 [shape = 'u32[]', space=smem, size = 0x4, offset = 0x4, fixed_abs, tag = 'smem constant byte address 0x4 - core index']
  #allocation1 [shape = 'u32[144,128]{1,0:T(1,128)}', space=vmem, size = 0x12000, scoped, tag = 'internal scratch']
  #allocation2 [shape = 'f32[128,64]{1,0:T(8,128)}', space=vmem, size = 0x10000, scoped, tag = 'scratch operand']
  %s0 = inlined_call_operand.vmem [shape: f32[256,64], index: 0, kind: input, shape index: {}]
  %s1 = inlined_call_operand.vmem [shape: f32[1,64], index: 1, kind: input, shape index: {}]
  %s2 = inlined_call_operand.vmem [shape: f32[1,64], index: 2, kind: input, shape index: {}]
  %s3 = inlined_call_operand.vmem [shape: f32[64,256], index: 3, kind: input, shape index: {}]
  %s4 = inlined_call_operand.vmem [shape: f32[1,256], index: 4, kind: input, shape index: {}]
  %s5 = inlined_call_operand.hbm [shape: f32[256,256], index: 5, kind: output, shape index: {}]
  %s6 = sld [smem:[#allocation0]]
  $region95: #{tpu_custom_call.1} parent=0
    _
  %s8 = ssub.s32 1, %s6
  %s9 = scalar_select 0, %s8, %s6
  $region1: #{tpu_custom_call.1} parent=0
    #allocation3 [shape = 'u8[65536]{0}', space=vmem, size = 0x10000, scoped, tag = 'input window, operand 3']
    #allocation4 [shape = 'u8[131072]{0}', space=vmem, size = 0x20000, scoped, tag = 'output window, operand 0']
    #allocation5 [shape = 's32[2]{0}', space=sflag, size = 0x8, scoped, tag = 'scoped memory for tpu_custom_call.1']
    %10 = vsyncpa [#allocation5], 0
    %s11 = scalar_lea.sflag [#allocation5], 1
    %12 = vsyncpa %s11, 0
    loop: start=0, step=1, limit=6
    $region2: #{tpu_custom_call.1} parent=1 // loop_pre_header
      _
    $region3: #{tpu_custom_call.1} parent=1 // loop_header
      %s14 = sphi 0, %s18
      %p15 = scmp.ge.s32.totalorder %s14, 6
      %s21 = sphi 0, %s33
      %s22 = sphi 0, %s29
      %s23 = sphi 0, %s21
      %s24 = sphi 0, %s22
      %s25 = sphi 0, %s23
      %s26 = sphi 0, %s24
      %s36 = sphi 0, %s38
      %s39 = sphi 0, %s36
      %s40 = sphi 0, %s39
      %s56 = sphi 0, %s40
      %s60 = sphi 0, %s60
      %s62 = sphi 0, %s60
      %s63 = sphi 0, %s62
      %s77 = sphi 0, %s63
      %s81 = sphi 0, %s81
      %s83 = sphi 0, %s81
      %s84 = sphi 0, %s83
      %s98 = sphi 0, %s84
      %s104 = sphi 0, %s106
      %s107 = sphi 0, %s104
      %s108 = sphi 0, %s107
      %s124 = sphi 0, %s108
      %s130 = sphi 0, %s132
      %s133 = sphi 0, %s130
      %s134 = sphi 0, %s133
      %s150 = sphi 0, %s134
      %s158 = sphi 0, %s160
      %s161 = sphi 0, %s158
      %s162 = sphi 0, %s161
      %s178 = sphi 0, %s162
    $region4: #{tpu_custom_call.1} parent=1 // loop_header_branch
      %17 = sbr.rel (%p15) target = $region8
    $region5: #{tpu_custom_call.1} parent=1 // loop_body
      %s19 = ssub.s32 %s14, 1
      %s20 = ssub.s32 %s14, 2
      %s27 = sadd.s32 1, %s22
      %p28 = scmp.ge.s32.totalorder %s27, 2
      %s29 = scalar_select %p28, 0, %s27
      %s30 = sadd.s32 1, %s21
      %s31 = scalar_select %p28, %s30, %s21
      %p32 = scmp.ge.s32.totalorder %s31, 2
      %s33 = scalar_select %p32, 0, %s31
      %s34 = ssub.s32 %s21, %s33
      %p35 = scmp.eq.s32.totalorder %s34, 0
      %s37 = sadd.s32 %s36, 1
      %s38 = scalar_select %p35, %s36, %s37
      %p41 = pneg %p35
      %p42 = scmp.eq.s32.totalorder %s14, 3
      %p43 = por %p41, %p42
      %p44 = scmp.ne.s32.totalorder %s36, %s39
      %p45 = scmp.eq.s32.totalorder %s14, 0
      %p46 = por %p44, %p45
      %p47 = scmp.ne.s32.totalorder %s36, %s39
      %p48 = scmp.eq.s32.totalorder %s19, 3
      %p49 = por %p47, %p48
      %p50 = scmp.ne.s32.totalorder %s39, %s40
      %p51 = scmp.eq.s32.totalorder %s19, 0
      %p52 = por %p50, %p51
      %p53 = scmp.ne.s32.totalorder %s39, %s40
      %p54 = scmp.eq.s32.totalorder %s20, 3
      %p55 = por %p53, %p54
      %p57 = scmp.ne.s32.totalorder %s40, %s56
      %p58 = scmp.eq.s32.totalorder %s20, 0
      %p59 = por %p57, %p58
      %s61 = sadd.s32 %s60, 1
      %p64 = scmp.eq.s32.totalorder %s14, 3
      %p65 = scmp.ne.s32.totalorder %s60, %s62
      %p66 = scmp.eq.s32.totalorder %s14, 0
      %p67 = por %p65, %p66
      %p68 = scmp.ne.s32.totalorder %s60, %s62
      %p69 = scmp.eq.s32.totalorder %s19, 3
      %p70 = por %p68, %p69
      %p71 = scmp.ne.s32.totalorder %s62, %s63
      %p72 = scmp.eq.s32.totalorder %s19, 0
      %p73 = por %p71, %p72
      %p74 = scmp.ne.s32.totalorder %s62, %s63
      %p75 = scmp.eq.s32.totalorder %s20, 3
      %p76 = por %p74, %p75
      %p78 = scmp.ne.s32.totalorder %s63, %s77
      %p79 = scmp.eq.s32.totalorder %s20, 0
      %p80 = por %p78, %p79
      %s82 = sadd.s32 %s81, 1
      %p85 = scmp.eq.s32.totalorder %s14, 3
      %p86 = scmp.ne.s32.totalorder %s81, %s83
      %p87 = scmp.eq.s32.totalorder %s14, 0
      %p88 = por %p86, %p87
      %p89 = scmp.ne.s32.totalorder %s81, %s83
      %p90 = scmp.eq.s32.totalorder %s19, 3
      %p91 = por %p89, %p90
      %p92 = scmp.ne.s32.totalorder %s83, %s84
      %p93 = scmp.eq.s32.totalorder %s19, 0
      %p94 = por %p92, %p93
      %p95 = scmp.ne.s32.totalorder %s83, %s84
      %p96 = scmp.eq.s32.totalorder %s20, 3
      %p97 = por %p95, %p96
      %p99 = scmp.ne.s32.totalorder %s84, %s98
      %p100 = scmp.eq.s32.totalorder %s20, 0
      %p101 = por %p99, %p100
      %s102 = ssub.s32 %s22, %s29
      %p103 = scmp.eq.s32.totalorder %s102, 0
      %s105 = sadd.s32 %s104, 1
      %s106 = scalar_select %p103, %s104, %s105
      %p109 = pneg %p103
      %p110 = scmp.eq.s32.totalorder %s14, 3
      %p111 = por %p109, %p110
      %p112 = scmp.ne.s32.totalorder %s104, %s107
      %p113 = scmp.eq.s32.totalorder %s14, 0
      %p114 = por %p112, %p113
      %p115 = scmp.ne.s32.totalorder %s104, %s107
      %p116 = scmp.eq.s32.totalorder %s19, 3
      %p117 = por %p115, %p116
      %p118 = scmp.ne.s32.totalorder %s107, %s108
      %p119 = scmp.eq.s32.totalorder %s19, 0
      %p120 = por %p118, %p119
      %p121 = scmp.ne.s32.totalorder %s107, %s108
      %p122 = scmp.eq.s32.totalorder %s20, 3
      %p123 = por %p121, %p122
      %p125 = scmp.ne.s32.totalorder %s108, %s124
      %p126 = scmp.eq.s32.totalorder %s20, 0
      %p127 = por %p125, %p126
      %s128 = ssub.s32 %s22, %s29
      %p129 = scmp.eq.s32.totalorder %s128, 0
      %s131 = sadd.s32 %s130, 1
      %s132 = scalar_select %p129, %s130, %s131
      %p135 = pneg %p129
      %p136 = scmp.eq.s32.totalorder %s14, 3
      %p137 = por %p135, %p136
      %p138 = scmp.ne.s32.totalorder %s130, %s133
      %p139 = scmp.eq.s32.totalorder %s14, 0
      %p140 = por %p138, %p139
      %p141 = scmp.ne.s32.totalorder %s130, %s133
      %p142 = scmp.eq.s32.totalorder %s19, 3
      %p143 = por %p141, %p142
      %p144 = scmp.ne.s32.totalorder %s133, %s134
      %p145 = scmp.eq.s32.totalorder %s19, 0
      %p146 = por %p144, %p145
      %p147 = scmp.ne.s32.totalorder %s133, %s134
      %p148 = scmp.eq.s32.totalorder %s20, 3
      %p149 = por %p147, %p148
      %p151 = scmp.ne.s32.totalorder %s134, %s150
      %p152 = scmp.eq.s32.totalorder %s20, 0
      %p153 = por %p151, %p152
      %s154 = ssub.s32 %s21, %s33
      %s155 = ssub.s32 %s22, %s29
      %s156 = sor.u32 %s154, %s155
      %p157 = scmp.eq.s32.totalorder %s156, 0
      %s159 = sadd.s32 %s158, 1
      %s160 = scalar_select %p157, %s158, %s159
      %p163 = pneg %p157
      %p164 = scmp.eq.s32.totalorder %s14, 3
      %p165 = por %p163, %p164
      %p166 = scmp.ne.s32.totalorder %s158, %s161
      %p167 = scmp.eq.s32.totalorder %s14, 0
      %p168 = por %p166, %p167
      %p169 = scmp.ne.s32.totalorder %s158, %s161
      %p170 = scmp.eq.s32.totalorder %s19, 3
      %p171 = por %p169, %p170
      %p172 = scmp.ne.s32.totalorder %s161, %s162
      %p173 = scmp.eq.s32.totalorder %s19, 0
      %p174 = por %p172, %p173
      %p175 = scmp.ne.s32.totalorder %s161, %s162
      %p176 = scmp.eq.s32.totalorder %s20, 3
      %p177 = por %p175, %p176
      %p179 = scmp.ne.s32.totalorder %s162, %s178
      %p180 = scmp.eq.s32.totalorder %s20, 0
      %p181 = por %p179, %p180
      %p182 = scmp.le.s32.totalorder 1, %s14
      %p183 = scmp.lt.s32.totalorder %s14, 5
      %p184 = pnand %p182, %p183
      %p185 = pneg %p184
      // Predicated region
      $region9: #{tpu_custom_call.1} parent=5 // pred_check
        _
      $region10: #{tpu_custom_call.1} parent=5 // pred_check_branch
        %187 = sbr.rel (%p184) target = $region12
      $region11: #{tpu_custom_call.1} parent=5 // pred_region
        %s188 = ssub.s32 %s14, 1
        // Predicated region
        $region13: #{tpu_custom_call.1} parent=11 // pred_check
          %p189 = pneg %p73
        $region14: #{tpu_custom_call.1} parent=11 // pred_check_branch
          %191 = sbr.rel (%p189) target = $region16
        $region15: #{tpu_custom_call.1} parent=11 // pred_region
          _
        $region16: #{tpu_custom_call.1} parent=11 // pred_fallthru
          _
        // Predicated region
        $region17: #{tpu_custom_call.1} parent=11 // pred_check
          %p192 = pneg %p94
        $region18: #{tpu_custom_call.1} parent=11 // pred_check_branch
          %194 = sbr.rel (%p192) target = $region20
        $region19: #{tpu_custom_call.1} parent=11 // pred_region
          _
        $region20: #{tpu_custom_call.1} parent=11 // pred_fallthru
          _
      $region12: #{tpu_custom_call.1} parent=5 // pred_fallthru
        _
      %p195 = scmp.lt.s32.totalorder %s14, 4
      // Predicated region
      $region21: #{tpu_custom_call.1} parent=5 // pred_check
        %p196 = pneg %p195
      $region22: #{tpu_custom_call.1} parent=5 // pred_check_branch
        %198 = sbr.rel (%p196) target = $region24
      $region23: #{tpu_custom_call.1} parent=5 // pred_region
        // Predicated region
        $region25: #{tpu_custom_call.1} parent=23 // pred_check
          %p199 = pneg %p46
        $region26: #{tpu_custom_call.1} parent=23 // pred_check_branch
          %201 = sbr.rel (%p199) target = $region28
        $region27: #{tpu_custom_call.1} parent=23 // pred_region
          %s202 = smul.u32 16, %s21
          %p203 = scmp.lt.s32.totalorder %s202, 31
          %s204 = scalar_select %p203, %s202, 31
          %s205 = smul.addr %s204, 8
          %s206 = scalar_lea.vmem %s0, %s205
          %s207 = smul.u32 16, %s21
        $region28: #{tpu_custom_call.1} parent=23 // pred_fallthru
          _
        // Predicated region
        $region29: #{tpu_custom_call.1} parent=23 // pred_check
          %p208 = pneg %p114
        $region30: #{tpu_custom_call.1} parent=23 // pred_check_branch
          %210 = sbr.rel (%p208) target = $region32
        $region31: #{tpu_custom_call.1} parent=23 // pred_region
          %s211 = sand.u32 %s104, 1
          %s212 = sand.u32 %s104, 1
          %s213 = smul.addr %s212, 64
          %s214 = scalar_lea.vmem [#allocation3], %s213
          %s215 = smul.addr %s22, 8
          %s216 = scalar_lea.vmem %s3, %s215
          // Predicated region
          $region33: #{tpu_custom_call.1} parent=31 // pred_check
            _
          $region34: #{tpu_custom_call.1} parent=31 // pred_check_branch
            %218 = sbr.rel (0) target = $region36
          $region35: #{tpu_custom_call.1} parent=31 // pred_region
            // Predicated region
            $region37: #{tpu_custom_call.1} parent=35 // pred_check
              _
            $region38: #{tpu_custom_call.1} parent=35 // pred_check_branch
              %220 = sbr.rel (0) target = $region40
            $region39: #{tpu_custom_call.1} parent=35 // pred_region
              // Predicated region
              $region52: #{tpu_custom_call.1} parent=39 // pred_check
                _
              $region53: #{tpu_custom_call.1} parent=39 // pred_check_branch
                %249 = sbr.rel (0) target = $region55
              $region54: #{tpu_custom_call.1} parent=39 // pred_region
                loop: start=0, step=1, limit=1
                $region56: #{tpu_custom_call.1} parent=54 // loop_pre_header
                  _
                $region57: #{tpu_custom_call.1} parent=54 // loop_header
                  %s251 = sphi 0, %s255
                  %p252 = scmp.ge.s32.totalorder %s251, 1
                  %s256 = sphi %s216, %s216
                  %s257 = sphi %s214, %s214
                $region58: #{tpu_custom_call.1} parent=54 // loop_header_branch
                  %254 = sbr.rel (%p252) target = $region62
                $region59: #{tpu_custom_call.1} parent=54 // loop_body
                  %v258 = vld [vmem:[%s256] sm:$0xff]
                  %259 = vst [vmem:[%s257] sm:$0xff] %v258
                  %v260 = vld [vmem:[%s256 + $0x10] sm:$0xff]
                  %261 = vst [vmem:[%s257 + $0x8] sm:$0xff] %v260
                  %v262 = vld [vmem:[%s256 + $0x20] sm:$0xff]
                  %263 = vst [vmem:[%s257 + $0x10] sm:$0xff] %v262
                  %v264 = vld [vmem:[%s256 + $0x30] sm:$0xff]
                  %265 = vst [vmem:[%s257 + $0x18] sm:$0xff] %v264
                  %v266 = vld [vmem:[%s256 + $0x40] sm:$0xff]
                  %267 = vst [vmem:[%s257 + $0x20] sm:$0xff] %v266
                  %v268 = vld [vmem:[%s256 + $0x50] sm:$0xff]
                  %269 = vst [vmem:[%s257 + $0x28] sm:$0xff] %v268
                  %v270 = vld [vmem:[%s256 + $0x60] sm:$0xff]
                  %271 = vst [vmem:[%s257 + $0x30] sm:$0xff] %v270
                  %v272 = vld [vmem:[%s256 + $0x70] sm:$0xff]
                  %273 = vst [vmem:[%s257 + $0x38] sm:$0xff] %v272
                $region60: #{tpu_custom_call.1} parent=54 // loop_footer
                  %s255 = sadd.s32 1, %s251
                $region61: #{tpu_custom_call.1} parent=54 // loop_footer_branch
                  %250 = sbr.rel target = $region57
                $region62: #{tpu_custom_call.1} parent=54 // loop_exit
                  _
              $region55: #{tpu_custom_call.1} parent=39 // pred_fallthru
                _
              // Predicated region
              $region63: #{tpu_custom_call.1} parent=39 // pred_check
                _
              $region64: #{tpu_custom_call.1} parent=39 // pred_check_branch
                %275 = sbr.rel target = $region66
              $region65: #{tpu_custom_call.1} parent=39 // pred_region
                _
              $region66: #{tpu_custom_call.1} parent=39 // pred_fallthru
                _
            $region40: #{tpu_custom_call.1} parent=35 // pred_fallthru
              _
            // Predicated region
            $region41: #{tpu_custom_call.1} parent=35 // pred_check
              _
            $region42: #{tpu_custom_call.1} parent=35 // pred_check_branch
              %222 = sbr.rel target = $region44
            $region43: #{tpu_custom_call.1} parent=35 // pred_region
              loop: start=0, step=1, limit=1
              $region45: #{tpu_custom_call.1} parent=43 // loop_pre_header
                _
              $region46: #{tpu_custom_call.1} parent=43 // loop_header
                %s225 = sphi 0, %s229
                %p226 = scmp.ge.s32.totalorder %s225, 1
                %s230 = sphi %s216, %s216
                %s231 = sphi %s214, %s214
              $region47: #{tpu_custom_call.1} parent=43 // loop_header_branch
                %228 = sbr.rel (%p226) target = $region51
              $region48: #{tpu_custom_call.1} parent=43 // loop_body
                %v232 = vld [vmem:[%s230] sm:$0xff]
                %233 = vst [vmem:[%s231] sm:$0xff] %v232
                %v234 = vld [vmem:[%s230 + $0x10] sm:$0xff]
                %235 = vst [vmem:[%s231 + $0x8] sm:$0xff] %v234
                %v236 = vld [vmem:[%s230 + $0x20] sm:$0xff]
                %237 = vst [vmem:[%s231 + $0x10] sm:$0xff] %v236
                %v238 = vld [vmem:[%s230 + $0x30] sm:$0xff]
                %239 = vst [vmem:[%s231 + $0x18] sm:$0xff] %v238
                %v240 = vld [vmem:[%s230 + $0x40] sm:$0xff]
                %241 = vst [vmem:[%s231 + $0x20] sm:$0xff] %v240
                %v242 = vld [vmem:[%s230 + $0x50] sm:$0xff]
                %243 = vst [vmem:[%s231 + $0x28] sm:$0xff] %v242
                %v244 = vld [vmem:[%s230 + $0x60] sm:$0xff]
                %245 = vst [vmem:[%s231 + $0x30] sm:$0xff] %v244
                %v246 = vld [vmem:[%s230 + $0x70] sm:$0xff]
                %247 = vst [vmem:[%s231 + $0x38] sm:$0xff] %v246
              $region49: #{tpu_custom_call.1} parent=43 // loop_footer
                %s229 = sadd.s32 1, %s225
              $region50: #{tpu_custom_call.1} parent=43 // loop_footer_branch
                %224 = sbr.rel target = $region46
              $region51: #{tpu_custom_call.1} parent=43 // loop_exit
                _
            $region44: #{tpu_custom_call.1} parent=35 // pred_fallthru
              _
          $region36: #{tpu_custom_call.1} parent=31 // pred_fallthru
            _
          %276 = vnop
        $region32: #{tpu_custom_call.1} parent=23 // pred_fallthru
          _
        // Predicated region
        $region67: #{tpu_custom_call.1} parent=23 // pred_check
          %p277 = pneg %p140
        $region68: #{tpu_custom_call.1} parent=23 // pred_check_branch
          %279 = sbr.rel (%p277) target = $region70
        $region69: #{tpu_custom_call.1} parent=23 // pred_region
          %p280 = scmp.lt.s32.totalorder %s22, 1
          %s281 = scalar_select %p280, %s22, 1
          %s282 = scalar_lea.vmem %s4, %s281
        $region70: #{tpu_custom_call.1} parent=23 // pred_fallthru
          _
      $region24: #{tpu_custom_call.1} parent=5 // pred_fallthru
        _
      %p283 = scmp.le.s32.totalorder 1, %s14
      %p284 = scmp.lt.s32.totalorder %s14, 5
      %p285 = pnand %p283, %p284
      %p286 = pneg %p285
      // Predicated region
      $region71: #{tpu_custom_call.1} parent=5 // pred_check
        _
      $region72: #{tpu_custom_call.1} parent=5 // pred_check_branch
        %288 = sbr.rel (%p285) target = $region74
      $region73: #{tpu_custom_call.1} parent=5 // pred_region
        %s289 = ssub.s32 %s14, 1
        %s290 = sand.u32 %s107, 1
        %s291 = sand.u32 %s107, 1
        %s292 = smul.addr %s291, 64
        %s293 = scalar_lea.vmem [#allocation3], %s292
        // Predicated region
        $region75: #{tpu_custom_call.1} parent=73 // pred_check
          %p294 = pneg %p120
        $region76: #{tpu_custom_call.1} parent=73 // pred_check_branch
          %296 = sbr.rel (%p294) target = $region78
        $region77: #{tpu_custom_call.1} parent=73 // pred_region
          _
        $region78: #{tpu_custom_call.1} parent=73 // pred_fallthru
          _
        %s297 = smul.u32 16, %s23
        %p298 = scmp.lt.s32.totalorder %s297, 31
        %s299 = scalar_select %p298, %s297, 31
        %s300 = smul.addr %s299, 8
        %s301 = scalar_lea.vmem %s0, %s300
        %p302 = pneg %p52
        %p303 = pneg %p49
        %p304 = pneg %p73
        %p305 = pneg %p70
        %p306 = pneg %p94
        %p307 = pneg %p91
        %s308 = sand.u32 %s107, 1
        %s309 = sand.u32 %s107, 1
        %s310 = smul.addr %s309, 64
        %s311 = scalar_lea.vmem [#allocation3], %s310
        %p312 = pneg %p120
        %p313 = pneg %p117
        %p314 = scmp.lt.s32.totalorder %s24, 1
        %s315 = scalar_select %p314, %s24, 1
        %s316 = scalar_lea.vmem %s4, %s315
        %p317 = pneg %p146
        %p318 = pneg %p143
        %p319 = pneg %p174
        %p320 = pneg %p171
        %s321 = sand.u32 %s161, 1
        %s322 = scalar_lea.sflag [#allocation5], %s321
        %s323 = sand.u32 %s161, 1
        %s324 = smul.addr %s323, 128
        %s325 = scalar_lea.vmem [#allocation4], %s324
        %s326 = smul.u32 16, %s23
        %p327 = scmp.lt.s32.totalorder %s326, 31
        %s328 = scalar_select %p327, %s326, 31
        %s329 = smul.addr %s328, 8
        %s330 = scalar_lea.vmem %s0, %s329
        %s331 = smul.u32 16, %s23
        %p332 = scmp.lt.s32.totalorder %s24, 1
        %s333 = scalar_select %p332, %s24, 1
        %s334 = scalar_lea.vmem %s4, %s333
        %s335 = smul.u32 16, %s23
        %p336 = scmp.eq.s32.totalorder %s24, 0
        // Predicated region
        $region79: #{tpu_custom_call.1} parent=73 // pred_check
          %p337 = pneg %p336
        $region80: #{tpu_custom_call.1} parent=73 // pred_check_branch
          %339 = sbr.rel (%p337) target = $region82
        $region81: #{tpu_custom_call.1} parent=73 // pred_region
          %v340 = vld [vmem:[%s330] sm:$0xff]
          %v341 = vld [vmem:[%s330 + $0x8] sm:$0xff]
          %v342 = vld [vmem:[%s330 + $0x10] sm:$0xff]
          %v343 = vld [vmem:[%s330 + $0x18] sm:$0xff]
          %v344 = vld [vmem:[%s330 + $0x20] sm:$0xff]
          %v345 = vld [vmem:[%s330 + $0x28] sm:$0xff]
          %v346 = vld [vmem:[%s330 + $0x30] sm:$0xff]
          %v347 = vld [vmem:[%s330 + $0x38] sm:$0xff]
          %v348 = vld [vmem:[%s330 + $0x40] sm:$0xff]
          %v349 = vld [vmem:[%s330 + $0x48] sm:$0xff]
          %v350 = vld [vmem:[%s330 + $0x50] sm:$0xff]
          %v351 = vld [vmem:[%s330 + $0x58] sm:$0xff]
          %v352 = vld [vmem:[%s330 + $0x60] sm:$0xff]
          %v353 = vld [vmem:[%s330 + $0x68] sm:$0xff]
          %v354 = vld [vmem:[%s330 + $0x70] sm:$0xff]
          %v355 = vld [vmem:[%s330 + $0x78] sm:$0xff]
          %vm356 = vcmask 523264
          %v357 = vsel %vm356, %v340, 0.0
          %358 = vadd.xlane.f32.xlu0 %v357
          %v359 = vpop.xlane.xlu0 %358
          %v360 = vsel %vm356, %v341, 0.0
          %361 = vadd.xlane.f32.xlu0 %v360
          %v362 = vpop.xlane.xlu0 %361
          %v363 = vsel %vm356, %v342, 0.0
          %364 = vadd.xlane.f32.xlu0 %v363
          %v365 = vpop.xlane.xlu0 %364
          %v366 = vsel %vm356, %v343, 0.0
          %367 = vadd.xlane.f32.xlu0 %v366
          %v368 = vpop.xlane.xlu0 %367
          %v369 = vsel %vm356, %v344, 0.0
          %370 = vadd.xlane.f32.xlu0 %v369
          %v371 = vpop.xlane.xlu0 %370
          %v372 = vsel %vm356, %v345, 0.0
          %373 = vadd.xlane.f32.xlu0 %v372
          %v374 = vpop.xlane.xlu0 %373
          %v375 = vsel %vm356, %v346, 0.0
          %376 = vadd.xlane.f32.xlu0 %v375
          %v377 = vpop.xlane.xlu0 %376
          %v378 = vsel %vm356, %v347, 0.0
          %379 = vadd.xlane.f32.xlu0 %v378
          %v380 = vpop.xlane.xlu0 %379
          %v381 = vsel %vm356, %v348, 0.0
          %382 = vadd.xlane.f32.xlu0 %v381
          %v383 = vpop.xlane.xlu0 %382
          %v384 = vsel %vm356, %v349, 0.0
          %385 = vadd.xlane.f32.xlu0 %v384
          %v386 = vpop.xlane.xlu0 %385
          %v387 = vsel %vm356, %v350, 0.0
          %388 = vadd.xlane.f32.xlu0 %v387
          %v389 = vpop.xlane.xlu0 %388
          %v390 = vsel %vm356, %v351, 0.0
          %391 = vadd.xlane.f32.xlu0 %v390
          %v392 = vpop.xlane.xlu0 %391
          %v393 = vsel %vm356, %v352, 0.0
          %394 = vadd.xlane.f32.xlu0 %v393
          %v395 = vpop.xlane.xlu0 %394
          %v396 = vsel %vm356, %v353, 0.0
          %397 = vadd.xlane.f32.xlu0 %v396
          %v398 = vpop.xlane.xlu0 %397
          %v399 = vsel %vm356, %v354, 0.0
          %400 = vadd.xlane.f32.xlu0 %v399
          %v401 = vpop.xlane.xlu0 %400
          %v402 = vsel %vm356, %v355, 0.0
          %403 = vadd.xlane.f32.xlu0 %v402
          %v404 = vpop.xlane.xlu0 %403
          %v405 = vrcp.pop 64.0
          %v406 = vmul.f32 %v359, %v405
          %v407 = vmul.f32 %v362, %v405
          %v408 = vmul.f32 %v365, %v405
          %v409 = vmul.f32 %v368, %v405
          %v410 = vmul.f32 %v371, %v405
          %v411 = vmul.f32 %v374, %v405
          %v412 = vmul.f32 %v377, %v405
          %v413 = vmul.f32 %v380, %v405
          %v414 = vmul.f32 %v383, %v405
          %v415 = vmul.f32 %v386, %v405
          %v416 = vmul.f32 %v389, %v405
          %v417 = vmul.f32 %v392, %v405
          %v418 = vmul.f32 %v395, %v405
          %v419 = vmul.f32 %v398, %v405
          %v420 = vmul.f32 %v401, %v405
          %v421 = vmul.f32 %v404, %v405
          %v422 = vsub.f32 %v340, %v406
          %v423 = vsub.f32 %v341, %v407
          %v424 = vsub.f32 %v342, %v408
          %v425 = vsub.f32 %v343, %v409
          %v426 = vsub.f32 %v344, %v410
          %v427 = vsub.f32 %v345, %v411
          %v428 = vsub.f32 %v346, %v412
          %v429 = vsub.f32 %v347, %v413
          %v430 = vsub.f32 %v348, %v414
          %v431 = vsub.f32 %v349, %v415
          %v432 = vsub.f32 %v350, %v416
          %v433 = vsub.f32 %v351, %v417
          %v434 = vsub.f32 %v352, %v418
          %v435 = vsub.f32 %v353, %v419
          %v436 = vsub.f32 %v354, %v420
          %v437 = vsub.f32 %v355, %v421
          %v438 = vmul.f32 %v422, %v422
          %v439 = vmul.f32 %v423, %v423
          %v440 = vmul.f32 %v424, %v424
          %v441 = vmul.f32 %v425, %v425
          %v442 = vmul.f32 %v426, %v426
          %v443 = vmul.f32 %v427, %v427
          %v444 = vmul.f32 %v428, %v428
          %v445 = vmul.f32 %v429, %v429
          %v446 = vmul.f32 %v430, %v430
          %v447 = vmul.f32 %v431, %v431
          %v448 = vmul.f32 %v432, %v432
          %v449 = vmul.f32 %v433, %v433
          %v450 = vmul.f32 %v434, %v434
          %v451 = vmul.f32 %v435, %v435
          %v452 = vmul.f32 %v436, %v436
          %v453 = vmul.f32 %v437, %v437
          %v454 = vsel %vm356, %v438, 0.0
          %455 = vadd.xlane.f32.xlu0 %v454
          %v456 = vpop.xlane.xlu0 %455
          %v457 = vsel %vm356, %v439, 0.0
          %458 = vadd.xlane.f32.xlu0 %v457
          %v459 = vpop.xlane.xlu0 %458
          %v460 = vsel %vm356, %v440, 0.0
          %461 = vadd.xlane.f32.xlu0 %v460
          %v462 = vpop.xlane.xlu0 %461
          %v463 = vsel %vm356, %v441, 0.0
          %464 = vadd.xlane.f32.xlu0 %v463
          %v465 = vpop.xlane.xlu0 %464
          %v466 = vsel %vm356, %v442, 0.0
          %467 = vadd.xlane.f32.xlu0 %v466
          %v468 = vpop.xlane.xlu0 %467
          %v469 = vsel %vm356, %v443, 0.0
          %470 = vadd.xlane.f32.xlu0 %v469
          %v471 = vpop.xlane.xlu0 %470
          %v472 = vsel %vm356, %v444, 0.0
          %473 = vadd.xlane.f32.xlu0 %v472
          %v474 = vpop.xlane.xlu0 %473
          %v475 = vsel %vm356, %v445, 0.0
          %476 = vadd.xlane.f32.xlu0 %v475
          %v477 = vpop.xlane.xlu0 %476
          %v478 = vsel %vm356, %v446, 0.0
          %479 = vadd.xlane.f32.xlu0 %v478
          %v480 = vpop.xlane.xlu0 %479
          %v481 = vsel %vm356, %v447, 0.0
          %482 = vadd.xlane.f32.xlu0 %v481
          %v483 = vpop.xlane.xlu0 %482
          %v484 = vsel %vm356, %v448, 0.0
          %485 = vadd.xlane.f32.xlu0 %v484
          %v486 = vpop.xlane.xlu0 %485
          %v487 = vsel %vm356, %v449, 0.0
          %488 = vadd.xlane.f32.xlu0 %v487
          %v489 = vpop.xlane.xlu0 %488
          %v490 = vsel %vm356, %v450, 0.0
          %491 = vadd.xlane.f32.xlu0 %v490
          %v492 = vpop.xlane.xlu0 %491
          %v493 = vsel %vm356, %v451, 0.0
          %494 = vadd.xlane.f32.xlu0 %v493
          %v495 = vpop.xlane.xlu0 %494
          %v496 = vsel %vm356, %v452, 0.0
          %497 = vadd.xlane.f32.xlu0 %v496
          %v498 = vpop.xlane.xlu0 %497
          %v499 = vsel %vm356, %v453, 0.0
          %500 = vadd.xlane.f32.xlu0 %v499
          %v501 = vpop.xlane.xlu0 %500
          %v502 = vmul.f32 %v456, %v405
          %v503 = vmul.f32 %v459, %v405
          %v504 = vmul.f32 %v462, %v405
          %v505 = vmul.f32 %v465, %v405
          %v506 = vmul.f32 %v468, %v405
          %v507 = vmul.f32 %v471, %v405
          %v508 = vmul.f32 %v474, %v405
          %v509 = vmul.f32 %v477, %v405
          %v510 = vmul.f32 %v480, %v405
          %v511 = vmul.f32 %v483, %v405
          %v512 = vmul.f32 %v486, %v405
          %v513 = vmul.f32 %v489, %v405
          %v514 = vmul.f32 %v492, %v405
          %v515 = vmul.f32 %v495, %v405
          %v516 = vmul.f32 %v498, %v405
          %v517 = vmul.f32 %v501, %v405
          %v518 = vadd.f32 %v502, 1e-05
          %v519 = vadd.f32 %v503, 1e-05
          %v520 = vadd.f32 %v504, 1e-05
          %v521 = vadd.f32 %v505, 1e-05
          %v522 = vadd.f32 %v506, 1e-05
          %v523 = vadd.f32 %v507, 1e-05
          %v524 = vadd.f32 %v508, 1e-05
          %v525 = vadd.f32 %v509, 1e-05
          %v526 = vadd.f32 %v510, 1e-05
          %v527 = vadd.f32 %v511, 1e-05
          %v528 = vadd.f32 %v512, 1e-05
          %v529 = vadd.f32 %v513, 1e-05
          %v530 = vadd.f32 %v514, 1e-05
          %v531 = vadd.f32 %v515, 1e-05
          %v532 = vadd.f32 %v516, 1e-05
          %v533 = vadd.f32 %v517, 1e-05
          %v534 = vrsqrt.pop %v518
          %v535 = vrsqrt.pop %v519
          %v536 = vrsqrt.pop %v520
          %v537 = vrsqrt.pop %v521
          %v538 = vrsqrt.pop %v522
          %v539 = vrsqrt.pop %v523
          %v540 = vrsqrt.pop %v524
          %v541 = vrsqrt.pop %v525
          %v542 = vrsqrt.pop %v526
          %v543 = vrsqrt.pop %v527
          %v544 = vrsqrt.pop %v528
          %v545 = vrsqrt.pop %v529
          %v546 = vrsqrt.pop %v530
          %v547 = vrsqrt.pop %v531
          %v548 = vrsqrt.pop %v532
          %v549 = vrsqrt.pop %v533
          %v550 = vld [vmem:[%s1] sm:$0x1]
          %v551 = vld [vmem:[%s2] sm:$0x1]
          %v552 = vmul.f32 %v422, %v534
          %v553 = vmul.f32 %v423, %v535
          %v554 = vmul.f32 %v424, %v536
          %v555 = vmul.f32 %v425, %v537
          %v556 = vmul.f32 %v426, %v538
          %v557 = vmul.f32 %v427, %v539
          %v558 = vmul.f32 %v428, %v540
          %v559 = vmul.f32 %v429, %v541
          %v560 = vmul.f32 %v430, %v542
          %v561 = vmul.f32 %v431, %v543
          %v562 = vmul.f32 %v432, %v544
          %v563 = vmul.f32 %v433, %v545
          %v564 = vmul.f32 %v434, %v546
          %v565 = vmul.f32 %v435, %v547
          %v566 = vmul.f32 %v436, %v548
          %v567 = vmul.f32 %v437, %v549
          %v569 = vlaneseq
          %v570 = vshrl.u32 %v569, 7
          %v571 = vsub.s32 0, %v570
          %v572 = vrot.slane %v550, %v571
          %v574 = vmul.f32 %v552, %v572
          %v575 = vmul.f32 %v553, %v572
          %v576 = vmul.f32 %v554, %v572
          %v577 = vmul.f32 %v555, %v572
          %v578 = vmul.f32 %v556, %v572
          %v579 = vmul.f32 %v557, %v572
          %v580 = vmul.f32 %v558, %v572
          %v581 = vmul.f32 %v559, %v572
          %v582 = vmul.f32 %v560, %v572
          %v583 = vmul.f32 %v561, %v572
          %v584 = vmul.f32 %v562, %v572
          %v585 = vmul.f32 %v563, %v572
          %v586 = vmul.f32 %v564, %v572
          %v587 = vmul.f32 %v565, %v572
          %v588 = vmul.f32 %v566, %v572
          %v589 = vmul.f32 %v567, %v572
          %v591 = vlaneseq
          %v592 = vshrl.u32 %v591, 7
          %v593 = vsub.s32 0, %v592
          %v594 = vrot.slane %v551, %v593
          %v596 = vadd.f32 %v574, %v594
          %v597 = vadd.f32 %v575, %v594
          %v598 = vadd.f32 %v576, %v594
          %v599 = vadd.f32 %v577, %v594
          %v600 = vadd.f32 %v578, %v594
          %v601 = vadd.f32 %v579, %v594
          %v602 = vadd.f32 %v580, %v594
          %v603 = vadd.f32 %v581, %v594
          %v604 = vadd.f32 %v582, %v594
          %v605 = vadd.f32 %v583, %v594
          %v606 = vadd.f32 %v584, %v594
          %v607 = vadd.f32 %v585, %v594
          %v608 = vadd.f32 %v586, %v594
          %v609 = vadd.f32 %v587, %v594
          %v610 = vadd.f32 %v588, %v594
          %v611 = vadd.f32 %v589, %v594
          %612 = vst.msk [vmem:[#allocation2] sm:$0xff] %vm356, %v596
          %613 = vst.msk [vmem:[#allocation2 + $0x8] sm:$0xff] %vm356, %v597
          %614 = vst.msk [vmem:[#allocation2 + $0x10] sm:$0xff] %vm356, %v598
          %615 = vst.msk [vmem:[#allocation2 + $0x18] sm:$0xff] %vm356, %v599
          %616 = vst.msk [vmem:[#allocation2 + $0x20] sm:$0xff] %vm356, %v600
          %617 = vst.msk [vmem:[#allocation2 + $0x28] sm:$0xff] %vm356, %v601
          %618 = vst.msk [vmem:[#allocation2 + $0x30] sm:$0xff] %vm356, %v602
          %619 = vst.msk [vmem:[#allocation2 + $0x38] sm:$0xff] %vm356, %v603
          %620 = vst.msk [vmem:[#allocation2 + $0x40] sm:$0xff] %vm356, %v604
          %621 = vst.msk [vmem:[#allocation2 + $0x48] sm:$0xff] %vm356, %v605
          %622 = vst.msk [vmem:[#allocation2 + $0x50] sm:$0xff] %vm356, %v606
          %623 = vst.msk [vmem:[#allocation2 + $0x58] sm:$0xff] %vm356, %v607
          %624 = vst.msk [vmem:[#allocation2 + $0x60] sm:$0xff] %vm356, %v608
          %625 = vst.msk [vmem:[#allocation2 + $0x68] sm:$0xff] %vm356, %v609
          %626 = vst.msk [vmem:[#allocation2 + $0x70] sm:$0xff] %vm356, %v610
          %627 = vst.msk [vmem:[#allocation2 + $0x78] sm:$0xff] %vm356, %v611
        $region82: #{tpu_custom_call.1} parent=73 // pred_fallthru
          _
        %v628 = vld [vmem:[#allocation2] sm:$0xff]
        %v629 = vld [vmem:[#allocation2 + $0x8] sm:$0xff]
        %v630 = vld [vmem:[#allocation2 + $0x10] sm:$0xff]
        %v631 = vld [vmem:[#allocation2 + $0x18] sm:$0xff]
        %v632 = vld [vmem:[#allocation2 + $0x20] sm:$0xff]
        %v633 = vld [vmem:[#allocation2 + $0x28] sm:$0xff]
        %v634 = vld [vmem:[#allocation2 + $0x30] sm:$0xff]
        %v635 = vld [vmem:[#allocation2 + $0x38] sm:$0xff]
        %v636 = vld [vmem:[#allocation2 + $0x40] sm:$0xff]
        %v637 = vld [vmem:[#allocation2 + $0x48] sm:$0xff]
        %v638 = vld [vmem:[#allocation2 + $0x50] sm:$0xff]
        %v639 = vld [vmem:[#allocation2 + $0x58] sm:$0xff]
        %v640 = vld [vmem:[#allocation2 + $0x60] sm:$0xff]
        %v641 = vld [vmem:[#allocation2 + $0x68] sm:$0xff]
        %v642 = vld [vmem:[#allocation2 + $0x70] sm:$0xff]
        %v643 = vld [vmem:[#allocation2 + $0x78] sm:$0xff]
        %v644 = vld [vmem:[%s293] sm:$0xff]
        %v645 = vld [vmem:[%s293 + $0x8] sm:$0xff]
        %v646 = vld [vmem:[%s293 + $0x10] sm:$0xff]
        %v647 = vld [vmem:[%s293 + $0x18] sm:$0xff]
        %v648 = vld [vmem:[%s293 + $0x20] sm:$0xff]
        %v649 = vld [vmem:[%s293 + $0x28] sm:$0xff]
        %v650 = vld [vmem:[%s293 + $0x30] sm:$0xff]
        %v651 = vld [vmem:[%s293 + $0x38] sm:$0xff]
        %v652 = vld [vmem:[%s334] sm:$0x1]
        %v654 = vlaneseq
        %v655 = vshrl.u32 %v654, 7
        %v656 = vsub.s32 0, %v655
        %v657 = vrot.slane %v652, %v656
        %vm659 = vcmask 523264
        %v661 = vsel %vm659, %v628, 0
        %v664 = vsel %vm659, %v629, 0
        %v667 = vsel %vm659, %v630, 0
        %v670 = vsel %vm659, %v631, 0
        %v673 = vsel %vm659, %v632, 0
        %v676 = vsel %vm659, %v633, 0
        %v679 = vsel %vm659, %v634, 0
        %v682 = vsel %vm659, %v635, 0
        %v685 = vsel %vm659, %v636, 0
        %v688 = vsel %vm659, %v637, 0
        %v691 = vsel %vm659, %v638, 0
        %v694 = vsel %vm659, %v639, 0
        %v697 = vsel %vm659, %v640, 0
        %v700 = vsel %vm659, %v641, 0
        %v703 = vsel %vm659, %v642, 0
        %v706 = vsel %vm659, %v643, 0
        %708 = vmatprep.subr.mxu0 0.0
        %709 = vmatpush1.msra.mxu0 %v644
        %710 = vmatprep.subr.mxu0 0.0
        %711 = vmatpush1.msra.mxu0 %v645
        %712 = vmatprep.subr.mxu0 0.0
        %713 = vmatpush1.msra.mxu0 %v646
        %714 = vmatprep.subr.mxu0 0.0
        %715 = vmatpush1.msra.mxu0 %v647
        %716 = vmatprep.subr.mxu0 0.0
        %717 = vmatpush1.msra.mxu0 %v648
        %718 = vmatprep.subr.mxu0 0.0
        %719 = vmatpush1.msra.mxu0 %v649
        %720 = vmatprep.subr.mxu0 0.0
        %721 = vmatpush1.msra.mxu0 %v650
        %722 = vmatprep.subr.mxu0 0.0
        %723 = vmatpush1.msra.mxu0 %v651
        %724 = vmatprep.subr.mxu0 0.0
        %725 = vmatpush1.msra.mxu0 0.0
        %726 = vmatprep.subr.mxu0 0.0
        %727 = vmatpush1.msra.mxu0 0.0
        %728 = vmatprep.subr.mxu0 0.0
        %729 = vmatpush1.msra.mxu0 0.0
        %730 = vmatprep.subr.mxu0 0.0
        %731 = vmatpush1.msra.mxu0 0.0
        %732 = vmatprep.subr.mxu0 0.0
        %733 = vmatpush1.msra.mxu0 0.0
        %734 = vmatprep.subr.mxu0 0.0
        %735 = vmatpush1.msra.mxu0 0.0
        %736 = vmatprep.subr.mxu0 0.0
        %737 = vmatpush1.msra.mxu0 0.0
        %738 = vmatprep.subr.mxu0 0.0
        %739 = vmatpush1.msra.mxu0 0.0
        %740 = vmatprep.subr.mxu0 0.0
        %741 = vmatpush1.msra.mxu0 0.0
        %742 = vmatprep.subr.mxu0 0.0
        %743 = vmatpush1.msra.mxu0 0.0
        %744 = vmatprep.subr.mxu0 0.0
        %745 = vmatpush1.msra.mxu0 0.0
        %746 = vmatprep.subr.mxu0 0.0
        %747 = vmatpush1.msra.mxu0 0.0
        %748 = vmatprep.subr.mxu0 0.0
        %749 = vmatpush1.msra.mxu0 0.0
        %750 = vmatprep.subr.mxu0 0.0
        %751 = vmatpush1.msra.mxu0 0.0
        %752 = vmatprep.subr.mxu0 0.0
        %753 = vmatpush1.msra.mxu0 0.0
        %754 = vmatprep.subr.mxu0 0.0
        %755 = vmatpush1.msra.mxu0 0.0
        %756 = vmatprep.subr.mxu0 0.0
        %757 = vmatpush1.msra.mxu0 0.0
        %758 = vmatprep.subr.mxu0 0.0
        %759 = vmatpush1.msra.mxu0 0.0
        %760 = vmatprep.subr.mxu0 0.0
        %761 = vmatpush1.msra.mxu0 0.0
        %762 = vmatprep.subr.mxu0 0.0
        %763 = vmatpush1.msra.mxu0 0.0
        %764 = vmatprep.subr.mxu0 0.0
        %765 = vmatpush1.msra.mxu0 0.0
        %766 = vmatprep.subr.mxu0 0.0
        %767 = vmatpush1.msra.mxu0 0.0
        %768 = vmatprep.subr.mxu0 0.0
        %769 = vmatpush1.msra.mxu0 0.0
        %770 = vmatprep.subr.mxu0 0.0
        %771 = vmatpush1.msra.mxu0 0.0
        %772 = vmatprep.mubr.f32.mxu0 0.0
        %773 = vmatmul.mubr.f32.gmra.mrb[0].mxu0 %v661
        %v774 = vpop.f32.mrb[0].mxu0
        %v775 = vadd.f32 %v657, %v774
        %v776 = vpop.f32.mrb[0].mxu0
        %777 = vmatprep.mubr.f32.mxu0 0.0
        %778 = vmatmul.mubr.f32.gmra.mrb[0].mxu0 %v664
        %v779 = vpop.f32.mrb[0].mxu0
        %v780 = vadd.f32 %v657, %v779
        %v781 = vpop.f32.mrb[0].mxu0
        %782 = vmatprep.mubr.f32.mxu0 0.0
        %783 = vmatmul.mubr.f32.gmra.mrb[0].mxu0 %v667
        %v784 = vpop.f32.mrb[0].mxu0
        %v785 = vadd.f32 %v657, %v784
        %v786 = vpop.f32.mrb[0].mxu0
        %787 = vmatprep.mubr.f32.mxu0 0.0
        %788 = vmatmul.mubr.f32.gmra.mrb[0].mxu0 %v670
        %v789 = vpop.f32.mrb[0].mxu0
        %v790 = vadd.f32 %v657, %v789
        %v791 = vpop.f32.mrb[0].mxu0
        %792 = vmatprep.mubr.f32.mxu0 0.0
        %793 = vmatmul.mubr.f32.gmra.mrb[0].mxu0 %v673
        %v794 = vpop.f32.mrb[0].mxu0
        %v795 = vadd.f32 %v657, %v794
        %v796 = vpop.f32.mrb[0].mxu0
        %797 = vmatprep.mubr.f32.mxu0 0.0
        %798 = vmatmul.mubr.f32.gmra.mrb[0].mxu0 %v676
        %v799 = vpop.f32.mrb[0].mxu0
        %v800 = vadd.f32 %v657, %v799
        %v801 = vpop.f32.mrb[0].mxu0
        %802 = vmatprep.mubr.f32.mxu0 0.0
        %803 = vmatmul.mubr.f32.gmra.mrb[0].mxu0 %v679
        %v804 = vpop.f32.mrb[0].mxu0
        %v805 = vadd.f32 %v657, %v804
        %v806 = vpop.f32.mrb[0].mxu0
        %807 = vmatprep.mubr.f32.mxu0 0.0
        %808 = vmatmul.mubr.f32.gmra.mrb[0].mxu0 %v682
        %v809 = vpop.f32.mrb[0].mxu0
        %v810 = vadd.f32 %v657, %v809
        %v811 = vpop.f32.mrb[0].mxu0
        %812 = vmatprep.mubr.f32.mxu0 0.0
        %813 = vmatmul.mubr.f32.gmra.mrb[0].mxu0 %v685
        %v814 = vpop.f32.mrb[0].mxu0
        %v815 = vadd.f32 %v657, %v814
        %v816 = vpop.f32.mrb[0].mxu0
        %817 = vmatprep.mubr.f32.mxu0 0.0
        %818 = vmatmul.mubr.f32.gmra.mrb[0].mxu0 %v688
        %v819 = vpop.f32.mrb[0].mxu0
        %v820 = vadd.f32 %v657, %v819
        %v821 = vpop.f32.mrb[0].mxu0
        %822 = vmatprep.mubr.f32.mxu0 0.0
        %823 = vmatmul.mubr.f32.gmra.mrb[0].mxu0 %v691
        %v824 = vpop.f32.mrb[0].mxu0
        %v825 = vadd.f32 %v657, %v824
        %v826 = vpop.f32.mrb[0].mxu0
        %827 = vmatprep.mubr.f32.mxu0 0.0
        %828 = vmatmul.mubr.f32.gmra.mrb[0].mxu0 %v694
        %v829 = vpop.f32.mrb[0].mxu0
        %v830 = vadd.f32 %v657, %v829
        %v831 = vpop.f32.mrb[0].mxu0
        %832 = vmatprep.mubr.f32.mxu0 0.0
        %833 = vmatmul.mubr.f32.gmra.mrb[0].mxu0 %v697
        %v834 = vpop.f32.mrb[0].mxu0
        %v835 = vadd.f32 %v657, %v834
        %v836 = vpop.f32.mrb[0].mxu0
        %837 = vmatprep.mubr.f32.mxu0 0.0
        %838 = vmatmul.mubr.f32.gmra.mrb[0].mxu0 %v700
        %v839 = vpop.f32.mrb[0].mxu0
        %v840 = vadd.f32 %v657, %v839
        %v841 = vpop.f32.mrb[0].mxu0
        %842 = vmatprep.mubr.f32.mxu0 0.0
        %843 = vmatmul.mubr.f32.gmra.mrb[0].mxu0 %v703
        %v844 = vpop.f32.mrb[0].mxu0
        %v845 = vadd.f32 %v657, %v844
        %v846 = vpop.f32.mrb[0].mxu0
        %847 = vmatprep.mubr.f32.mxu0 0.0
        %848 = vmatmul.mubr.f32.gmra.mrb[0].mxu0 %v706
        %v849 = vpop.f32.mrb[0].mxu0
        %v850 = vadd.f32 %v657, %v849
        %v851 = vpop.f32.mrb[0].mxu0
        %852 = vdwg.mxu0
        %853 = vst [vmem:[%s325] sm:$0xff] %v775
        %854 = vst [vmem:[%s325 + $0x8] sm:$0xff] %v780
        %855 = vst [vmem:[%s325 + $0x10] sm:$0xff] %v785
        %856 = vst [vmem:[%s325 + $0x18] sm:$0xff] %v790
        %857 = vst [vmem:[%s325 + $0x20] sm:$0xff] %v795
        %858 = vst [vmem:[%s325 + $0x28] sm:$0xff] %v800
        %859 = vst [vmem:[%s325 + $0x30] sm:$0xff] %v805
        %860 = vst [vmem:[%s325 + $0x38] sm:$0xff] %v810
        %861 = vst [vmem:[%s325 + $0x40] sm:$0xff] %v815
        %862 = vst [vmem:[%s325 + $0x48] sm:$0xff] %v820
        %863 = vst [vmem:[%s325 + $0x50] sm:$0xff] %v825
        %864 = vst [vmem:[%s325 + $0x58] sm:$0xff] %v830
        %865 = vst [vmem:[%s325 + $0x60] sm:$0xff] %v835
        %866 = vst [vmem:[%s325 + $0x68] sm:$0xff] %v840
        %867 = vst [vmem:[%s325 + $0x70] sm:$0xff] %v845
        %868 = vst [vmem:[%s325 + $0x78] sm:$0xff] %v850
        %s869 = sand.u32 %s161, 1
        %s870 = scalar_lea.sflag [#allocation5], %s869
        %s871 = sand.u32 %s161, 1
        %s872 = smul.addr %s871, 128
        %s873 = scalar_lea.vmem [#allocation4], %s872
        // Predicated region
        $region83: #{tpu_custom_call.1} parent=73 // pred_check
          %p874 = pneg %p171
        $region84: #{tpu_custom_call.1} parent=73 // pred_check_branch
          %876 = sbr.rel (%p874) target = $region86
        $region85: #{tpu_custom_call.1} parent=73 // pred_region
          %s877 = smul.u32 16, %s23
          %s879 = ssub.s32 2048, 2048
          %880 = vsyncadd %s870, %s879
          %s881 = smul.addr %s877, 2
          %s882 = sadd.s32 %s24, %s881
          %s883 = smul.addr %s882, 128
          %s884 = scalar_lea.hbm %s5, %s883
          %s885 = sshll.u32 %s873, 4
          %s886 = int_to_ptr.vmem [resolvable:$true] %s885
          %891 = dma.vmem_to_hbm [thread:$0]  %s886, 2048, %s884, %s870, 128, 256, 8
        $region86: #{tpu_custom_call.1} parent=73 // pred_fallthru
          _
      $region74: #{tpu_custom_call.1} parent=5 // pred_fallthru
        _
      %p892 = scmp.le.s32.totalorder 2, %s14
      // Predicated region
      $region87: #{tpu_custom_call.1} parent=5 // pred_check
        %p893 = pneg %p892
      $region88: #{tpu_custom_call.1} parent=5 // pred_check_branch
        %895 = sbr.rel (%p893) target = $region90
      $region89: #{tpu_custom_call.1} parent=5 // pred_region
        %s896 = ssub.s32 %s14, 2
        // Predicated region
        $region91: #{tpu_custom_call.1} parent=89 // pred_check
          %p897 = pneg %p177
        $region92: #{tpu_custom_call.1} parent=89 // pred_check_branch
          %899 = sbr.rel (%p897) target = $region94
        $region93: #{tpu_custom_call.1} parent=89 // pred_region
          %s900 = sand.u32 %s162, 1
          %s901 = scalar_lea.sflag [#allocation5], %s900
          %s902 = sand.u32 %s162, 1
          %s903 = smul.addr %s902, 128
          %s904 = scalar_lea.vmem [#allocation4], %s903
          %905 = dma.done %s901, 2048
        $region94: #{tpu_custom_call.1} parent=89 // pred_fallthru
          _
      $region90: #{tpu_custom_call.1} parent=5 // pred_fallthru
        _
    $region6: #{tpu_custom_call.1} parent=1 // loop_footer
      %s18 = sadd.s32 1, %s14
    $region7: #{tpu_custom_call.1} parent=1 // loop_footer_branch
      %13 = sbr.rel target = $region3
    $region8: #{tpu_custom_call.1} parent=1 // loop_exit
      _
    %906 = vsyncpa [#allocation5], 1
    %s907 = scalar_lea.sflag [#allocation5], 1
    %908 = vsyncpa %s907, 1

</llo_original>
